<compile_context>
chip_gen: v7x
topology: tpu7x:2x2x1
jax: 0.10.0
libtpu: 0.0.40
codegen_flags: <defaults>
</compile_context>

<pallas_src>
import jax
import jax.numpy as jnp
from jax.experimental import pallas as pl
from jax.experimental.pallas import tpu as pltpu


# ---------------------------------------------------------------------------
# Pallas kernel: the score_function MLP (Linear+ReLU, Linear+ReLU, Linear)
# ---------------------------------------------------------------------------
def _score_mlp_kernel(x_ref, w1_ref, b1_ref, w2_ref, b2_ref, w3_ref, o_ref):
    x = x_ref[...]                                                      # (tm, 2D) bf16
    h1 = jnp.dot(x, w1_ref[...], preferred_element_type=jnp.float32) + b1_ref[...]
    h1 = jnp.maximum(h1, 0.0).astype(jnp.bfloat16)                      # ReLU (f32) -> bf16
    h2 = jnp.dot(h1, w2_ref[...], preferred_element_type=jnp.float32) + b2_ref[...]
    h2 = jnp.maximum(h2, 0.0).astype(jnp.bfloat16)                      # ReLU (f32) -> bf16
    # Lane-dense (tm, 128) store; real score lives in column 0 (w3 zero-padded).
    o_ref[...] = jnp.dot(h2, w3_ref[...], preferred_element_type=jnp.float32)


def score_function_pallas(x, params, tm=512):
    """Apply the 2D->128->64->1 MLP to every row of x via a Pallas kernel.

    Returns a vector of scores, shape [M]."""
    w1, b1, w2, b2, w3, b3 = params
    m, d2 = x.shape

    # Minimal tail pad so the row axis is a multiple of 8 (sublane); ragged
    # last blocks beyond that are handled by the grid (masked loads/stores).
    m8 = pl.cdiv(m, 8) * 8
    if m8 != m:
        x = jnp.pad(x, ((0, m8 - m), (0, 0)))
    tm = min(tm, m8)

    h2_dim = w2.shape[1]          # 64
    out_cols = 128                # lane-dense output width

    # Zero-pad w3 (h2_dim, 1) -> (h2_dim, 128); b3 folded in the wrapper below.
    w3p = jnp.zeros((h2_dim, out_cols), w3.dtype).at[:, :1].set(w3)

    # bf16 MXU operands; accumulation / bias / ReLU stay f32 inside the kernel.
    x_bf = x.astype(jnp.bfloat16)
    w1_bf = w1.astype(jnp.bfloat16)
    w2_bf = w2.astype(jnp.bfloat16)
    w3_bf = w3p.astype(jnp.bfloat16)

    full = lambda i: (0, 0)       # weights/biases: resident, same block every step
    out = pl.pallas_call(
        _score_mlp_kernel,
        out_shape=jax.ShapeDtypeStruct((m8, out_cols), jnp.float32),
        grid=(pl.cdiv(m8, tm),),
        in_specs=[
            pl.BlockSpec((tm, d2), lambda i: (i, 0)),
            pl.BlockSpec(w1_bf.shape, full),
            pl.BlockSpec(b1.shape, full),
            pl.BlockSpec(w2_bf.shape, full),
            pl.BlockSpec(b2.shape, full),
            pl.BlockSpec(w3_bf.shape, full),
        ],
        out_specs=pl.BlockSpec((tm, out_cols), lambda i: (i, 0)),
        compiler_params=pltpu.CompilerParams(dimension_semantics=("parallel",)),
    )(x_bf, w1_bf, b1, w2_bf, b2, w3_bf)

    # Fold the scalar b3 here (avoids a (1,1) VMEM tile in the kernel).
    return out[:m, 0] + b3[0, 0]


# ---------------------------------------------------------------------------
# Parameter init (deterministic, PyTorch Linear-style U(-1/sqrt(fan_in), ..))
# ---------------------------------------------------------------------------
def init_mlp_decoder_params(key, input_dim):
    def linear(k, fan_in, fan_out):
        kw, kb = jax.random.split(k)
        bound = 1.0 / float(fan_in) ** 0.5
        w = jax.random.uniform(kw, (fan_in, fan_out), jnp.float32, -bound, bound)
        b = jax.random.uniform(kb, (1, fan_out), jnp.float32, -bound, bound)
        return w, b

    k1, k2, k3 = jax.random.split(key, 3)
    w1, b1 = linear(k1, 2 * input_dim, 128)
    w2, b2 = linear(k2, 128, 64)
    w3, b3 = linear(k3, 64, 1)
    return (w1, b1, w2, b2, w3, b3)


# ---------------------------------------------------------------------------
# MLPDecoder.forward
# ---------------------------------------------------------------------------
def mlp_decoder_forward(params, drug_num, embed, h, t, n_s, split_negatives=None):
    """
    embed: [N, D] float32 node embeddings
    h:     [B, 1] int32 head indices
    t:     [B, T] int32 tail indices
    n_s:   [B, Nneg] int32 negative-sample indices
    split_negatives: static Python bool mirroring `torch.max(n_s < drug_num)`.
        Pass it explicitly under jit; if None it is computed on the host.
    Returns (pos_score [B, T], neg_score).
    """
    # Dropout / sigmoid exist in __init__ but are never used in forward.
    if split_negatives is None:
        # Host fallback (NOT jit-traceable) — pass the flag explicitly under jit.
        split_negatives = bool(jax.device_get(jnp.any(n_s < drug_num)))

    if split_negatives:
        c = (n_s.shape[1] + 1) // 2            # torch.chunk(n_s, 2, dim=1) sizes
        n_t, n_h = n_s[:, :c], n_s[:, c:]
    else:
        n_t, n_h = n_s, None

    B, T = t.shape
    D = embed.shape[1]

    # TODO(synk): for large M, factor layer 1 as x_left@w1[:D] + x_right@w1[D:]
    # with the repeated head contribution computed once per unique head; this
    # halves streamed HBM bytes and layer-1 MXU work (needs per-row head index
    # plumbed into the kernel, e.g. via scalar prefetch).
    h_embed = embed[h]                          # [B, 1, D]
    t_embed = embed[t]                          # [B, T, D]
    pos_sample = jnp.concatenate([jnp.tile(h_embed, (1, T, 1)), t_embed], -1)   # [B,T,2D]

    neg_num = n_t.shape[1]
    neg_sample1 = jnp.concatenate(
        [jnp.tile(h_embed, (1, neg_num, 1)), embed[n_t]], -1)                   # [B,neg,2D]

    rows = [pos_sample.reshape(-1, 2 * D), neg_sample1.reshape(-1, 2 * D)]
    if n_h is not None:
        neg_sample2 = jnp.concatenate(
            [embed[n_h], jnp.tile(t_embed, (1, neg_num, 1))], -1)               # [B,neg,2D]
        rows.append(neg_sample2.reshape(-1, 2 * D))

    x = jnp.concatenate(rows, axis=0)                                           # [M, 2D]
    scores = score_function_pallas(x, params)                                   # [M]

    n_pos = B * T
    pos_score = scores[:n_pos].reshape(B, T)
    neg_score = scores[n_pos:n_pos + B * neg_num].reshape(B, neg_num)
    if n_h is not None:
        neg_score2 = scores[n_pos + B * neg_num:].reshape(B, -1)
        neg_score = jnp.concatenate([neg_score, neg_score2], axis=1)
    return pos_score, neg_score


# ---------------------------------------------------------------------------
# Pure-JAX reference (same bf16-operand / f32-accumulate numerics as kernel)
# ---------------------------------------------------------------------------
def _score_mlp_ref(x, params):
    w1, b1, w2, b2, w3, b3 = params
    bf = jnp.bfloat16
    h1 = jnp.maximum(
        jnp.dot(x.astype(bf), w1.astype(bf), preferred_element_type=jnp.float32) + b1, 0.0)
    h2 = jnp.maximum(
        jnp.dot(h1.astype(bf), w2.astype(bf), preferred_element_type=jnp.float32) + b2, 0.0)
    return jnp.dot(h2.astype(bf), w3.astype(bf), preferred_element_type=jnp.float32) + b3


if __name__ == "__main__":
    key = jax.random.PRNGKey(0)
    k_embed, k_params, k_idx = jax.random.split(key, 3)

    input_dim = 16
    drug_num = 4
    num_nodes = 12          # 4 drugs + 8 diseases
    B, T, Nneg = 2, 1, 4

    embed = jax.random.normal(k_embed, (num_nodes, input_dim), jnp.float32)
    params = init_mlp_decoder_params(k_params, input_dim)

    k_h, k_t, k_n = jax.random.split(k_idx, 3)
    h = jax.random.randint(k_h, (B, 1), 0, drug_num, jnp.int32)
    t = jax.random.randint(k_t, (B, T), drug_num, num_nodes, jnp.int32)
    n_s = jax.random.randint(k_n, (B, Nneg), 0, drug_num, jnp.int32)      # all < drug_num

    # ---- branch 1: n_s < drug_num  ->  negatives are split (tail / head) ----
    pos_score, neg_score = mlp_decoder_forward(
        params, drug_num, embed, h, t, n_s, split_negatives=True)
    pos_score = jax.block_until_ready(pos_score)
    neg_score = jax.block_until_ready(neg_score)

    def ref_split():
        c = (Nneg + 1) // 2
        n_t, n_h = n_s[:, :c], n_s[:, c:]
        h_e, t_e = embed[h], embed[t]
        pos = jnp.concatenate([jnp.tile(h_e, (1, T, 1)), t_e], -1)
        neg1 = jnp.concatenate([jnp.tile(h_e, (1, c, 1)), embed[n_t]], -1)
        neg2 = jnp.concatenate([embed[n_h], jnp.tile(t_e, (1, c, 1))], -1)
        p = _score_mlp_ref(pos.reshape(-1, 2 * input_dim), params)[:, 0].reshape(B, T)
        n1 = _score_mlp_ref(neg1.reshape(-1, 2 * input_dim), params)[:, 0].reshape(B, -1)
        n2 = _score_mlp_ref(neg2.reshape(-1, 2 * input_dim), params)[:, 0].reshape(B, -1)
        return p, jnp.concatenate([n1, n2], axis=1)

    ref_pos, ref_neg = ref_split()
    assert pos_score.shape == (B, T) and neg_score.shape == (B, Nneg)
    assert jnp.allclose(pos_score, ref_pos, atol=1e-3, rtol=1e-3), "pos_score mismatch"
    assert jnp.allclose(neg_score, ref_neg, atol=1e-3, rtol=1e-3), "neg_score mismatch"

    # ---- branch 2: negatives are all diseases  ->  no split ----
    n_s2 = jax.random.randint(k_n, (B, Nneg), drug_num, num_nodes, jnp.int32)
    pos2, neg2 = mlp_decoder_forward(
        params, drug_num, embed, h, t, n_s2, split_negatives=False)
    pos2 = jax.block_until_ready(pos2)
    neg2 = jax.block_until_ready(neg2)

    def ref_nosplit():
        h_e, t_e = embed[h], embed[t]
        pos = jnp.concatenate([jnp.tile(h_e, (1, T, 1)), t_e], -1)
        neg = jnp.concatenate([jnp.tile(h_e, (1, Nneg, 1)), embed[n_s2]], -1)
        p = _score_mlp_ref(pos.reshape(-1, 2 * input_dim), params)[:, 0].reshape(B, T)
        n = _score_mlp_ref(neg.reshape(-1, 2 * input_dim), params)[:, 0].reshape(B, -1)
        return p, n

    ref_pos2, ref_neg2 = ref_nosplit()
    assert pos2.shape == (B, T) and neg2.shape == (B, Nneg)
    assert jnp.allclose(pos2, ref_pos2, atol=1e-3, rtol=1e-3), "pos_score (no-split) mismatch"
    assert jnp.allclose(neg2, ref_neg2, atol=1e-3, rtol=1e-3), "neg_score (no-split) mismatch"

    print("KERNEL_OK")
</pallas_src>

<mosaic_0001>
module attributes {stable_mosaic.version = 11 : i64} {
  func.func @_score_mlp_kernel(%arg0: i32, %arg1: memref<16x32xbf16, #tpu.memory_space<vmem>>, %arg2: memref<32x128xbf16, #tpu.memory_space<vmem>>, %arg3: memref<1x128xf32, #tpu.memory_space<vmem>>, %arg4: memref<128x64xbf16, #tpu.memory_space<vmem>>, %arg5: memref<1x64xf32, #tpu.memory_space<vmem>>, %arg6: memref<64x128xbf16, #tpu.memory_space<vmem>>, %arg7: memref<16x128xf32, #tpu.memory_space<vmem>>) attributes {dimension_semantics = [#tpu.dimension_semantics<parallel>], iteration_bounds = array<i64: 1>, scalar_prefetch = 0 : i64, scratch_operands = 0 : i64, tpu.core_type = #tpu.core_type<tc>, window_params = [{transform_indices = @transform_0, window_bounds = array<i64: 16, 32>}, {pipeline_mode = #tpu.pipeline_mode<synchronous>, transform_indices = @transform_1, window_bounds = array<i64: 32, 128>}, {pipeline_mode = #tpu.pipeline_mode<synchronous>, transform_indices = @transform_2, window_bounds = array<i64: 1, 128>}, {pipeline_mode = #tpu.pipeline_mode<synchronous>, transform_indices = @transform_3, window_bounds = array<i64: 128, 64>}, {pipeline_mode = #tpu.pipeline_mode<synchronous>, transform_indices = @transform_4, window_bounds = array<i64: 1, 64>}, {pipeline_mode = #tpu.pipeline_mode<synchronous>, transform_indices = @transform_5, window_bounds = array<i64: 64, 128>}, {transform_indices = @transform_6, window_bounds = array<i64: 16, 128>}]} {
    %c0 = arith.constant 0 : index
    %c0_0 = arith.constant 0 : index
    %0 = vector.load %arg1[%c0, %c0_0] : memref<16x32xbf16, #tpu.memory_space<vmem>>, vector<16x32xbf16>
    %c0_1 = arith.constant 0 : index
    %c0_2 = arith.constant 0 : index
    %1 = vector.load %arg2[%c0_1, %c0_2] : memref<32x128xbf16, #tpu.memory_space<vmem>>, vector<32x128xbf16>
    %cst = arith.constant dense<0.000000e+00> : vector<16x128xf32>
    %2 = tpu.matmul %0, %1, %cst {dimension_numbers = #tpu.dot_dimension_numbers<[1], [0], [0], [1], [0, 0, 1, 1], [], []>} : vector<16x32xbf16>, vector<32x128xbf16>, vector<16x128xf32> -> vector<16x128xf32>
    %c0_3 = arith.constant 0 : index
    %c0_4 = arith.constant 0 : index
    %3 = vector.load %arg3[%c0_3, %c0_4] : memref<1x128xf32, #tpu.memory_space<vmem>>, vector<1x128xf32>
    %4 = vector.broadcast %3 : vector<1x128xf32> to vector<16x128xf32>
    %5 = arith.addf %2, %4 : vector<16x128xf32>
    %cst_5 = arith.constant 0.000000e+00 : f32
    %6 = vector.broadcast %cst_5 : f32 to vector<16x128xf32>
    %7 = arith.maximumf %5, %6 : vector<16x128xf32>
    %8 = arith.truncf %7 : vector<16x128xf32> to vector<16x128xbf16>
    %c0_6 = arith.constant 0 : index
    %c0_7 = arith.constant 0 : index
    %9 = vector.load %arg4[%c0_6, %c0_7] : memref<128x64xbf16, #tpu.memory_space<vmem>>, vector<128x64xbf16>
    %cst_8 = arith.constant dense<0.000000e+00> : vector<16x64xf32>
    %10 = tpu.matmul %8, %9, %cst_8 {dimension_numbers = #tpu.dot_dimension_numbers<[1], [0], [0], [1], [0, 0, 1, 1], [], []>} : vector<16x128xbf16>, vector<128x64xbf16>, vector<16x64xf32> -> vector<16x64xf32>
    %c0_9 = arith.constant 0 : index
    %c0_10 = arith.constant 0 : index
    %11 = vector.load %arg5[%c0_9, %c0_10] : memref<1x64xf32, #tpu.memory_space<vmem>>, vector<1x64xf32>
    %12 = vector.broadcast %11 : vector<1x64xf32> to vector<16x64xf32>
    %13 = arith.addf %10, %12 : vector<16x64xf32>
    %cst_11 = arith.constant 0.000000e+00 : f32
    %14 = vector.broadcast %cst_11 : f32 to vector<16x64xf32>
    %15 = arith.maximumf %13, %14 : vector<16x64xf32>
    %16 = arith.truncf %15 : vector<16x64xf32> to vector<16x64xbf16>
    %c0_12 = arith.constant 0 : index
    %c0_13 = arith.constant 0 : index
    %17 = vector.load %arg6[%c0_12, %c0_13] : memref<64x128xbf16, #tpu.memory_space<vmem>>, vector<64x128xbf16>
    %cst_14 = arith.constant dense<0.000000e+00> : vector<16x128xf32>
    %18 = tpu.matmul %16, %17, %cst_14 {dimension_numbers = #tpu.dot_dimension_numbers<[1], [0], [0], [1], [0, 0, 1, 1], [], []>} : vector<16x64xbf16>, vector<64x128xbf16>, vector<16x128xf32> -> vector<16x128xf32>
    %c0_15 = arith.constant 0 : index
    %c0_16 = arith.constant 0 : index
    %19 = vector.load %arg7[%c0_15, %c0_16] : memref<16x128xf32, #tpu.memory_space<vmem>>, vector<16x128xf32>
    tpu.vector_store %arg7[%c0_15, %c0_16], %18 {strides = array<i32>} : memref<16x128xf32, #tpu.memory_space<vmem>>, vector<16x128xf32>,
    return
  }
  func.func @transform_0(%arg0: i32) -> (i32, i32) {
    %c0_i32 = arith.constant 0 : i32
    %c0_i32_0 = arith.constant 0 : i32
    return %arg0, %c0_i32 : i32, i32
  }
  func.func @transform_1(%arg0: i32) -> (i32, i32) {
    %c0_i32 = arith.constant 0 : i32
    %c0_i32_0 = arith.constant 0 : i32
    %c0_i32_1 = arith.constant 0 : i32
    return %c0_i32, %c0_i32_0 : i32, i32
  }
  func.func @transform_2(%arg0: i32) -> (i32, i32) {
    %c0_i32 = arith.constant 0 : i32
    %c0_i32_0 = arith.constant 0 : i32
    %c0_i32_1 = arith.constant 0 : i32
    return %c0_i32, %c0_i32_0 : i32, i32
  }
  func.func @transform_3(%arg0: i32) -> (i32, i32) {
    %c0_i32 = arith.constant 0 : i32
    %c0_i32_0 = arith.constant 0 : i32
    %c0_i32_1 = arith.constant 0 : i32
    return %c0_i32, %c0_i32_0 : i32, i32
  }
  func.func @transform_4(%arg0: i32) -> (i32, i32) {
    %c0_i32 = arith.constant 0 : i32
    %c0_i32_0 = arith.constant 0 : i32
    %c0_i32_1 = arith.constant 0 : i32
    return %c0_i32, %c0_i32_0 : i32, i32
  }
  func.func @transform_5(%arg0: i32) -> (i32, i32) {
    %c0_i32 = arith.constant 0 : i32
    %c0_i32_0 = arith.constant 0 : i32
    %c0_i32_1 = arith.constant 0 : i32
    return %c0_i32, %c0_i32_0 : i32, i32
  }
  func.func @transform_6(%arg0: i32) -> (i32, i32) {
    %c0_i32 = arith.constant 0 : i32
    %c0_i32_0 = arith.constant 0 : i32
    return %arg0, %c0_i32 : i32, i32
  }
}

</mosaic_0001>

<llo_original>
// kernel: tpu_custom_call.1
$region0: #{tpu_custom_call.1}
  #allocation0 [shape = 'u32[]', space=smem, size = 0x4, offset = 0x4, fixed_abs, tag = 'smem constant byte address 0x4 - core index']
  #allocation1 [shape = 'u32[144,128]{1,0:T(1,128)}', space=vmem, size = 0x12000, scoped, tag = 'internal scratch']
  %s0 = inlined_call_operand.vmem [shape: bf16[16,32], index: 0, kind: input, shape index: {}]
  %s1 = inlined_call_operand.vmem [shape: bf16[32,128], index: 1, kind: input, shape index: {}]
  %s2 = inlined_call_operand.vmem [shape: f32[1,128], index: 2, kind: input, shape index: {}]
  %s3 = inlined_call_operand.vmem [shape: bf16[128,64], index: 3, kind: input, shape index: {}]
  %s4 = inlined_call_operand.vmem [shape: f32[1,64], index: 4, kind: input, shape index: {}]
  %s5 = inlined_call_operand.vmem [shape: bf16[64,128], index: 5, kind: input, shape index: {}]
  %s6 = inlined_call_operand.hbm [shape: f32[16,128], index: 6, kind: output, shape index: {}]
  %s7 = sld [smem:[#allocation0]]
  $region34: #{tpu_custom_call.1} parent=0
    _
  %s9 = ssub.s32 1, %s7
  %s10 = scalar_select 0, %s9, %s7
  $region1: #{tpu_custom_call.1} parent=0
    #allocation2 [shape = 'u8[8192]{0}', space=vmem, size = 0x2000, scoped, tag = 'output window, operand 0, single buffered']
    #allocation3 [shape = 's32[1]{0}', space=sflag, size = 0x4, scoped, tag = 'scoped memory for tpu_custom_call.1']
    %11 = vsyncpa [#allocation3], 0
    // Predicated region
    $region2: #{tpu_custom_call.1} parent=1 // pred_check
      _
    $region3: #{tpu_custom_call.1} parent=1 // pred_check_branch
      %13 = sbr.rel (0) target = $region5
    $region4: #{tpu_custom_call.1} parent=1 // pred_region
      _
    $region5: #{tpu_custom_call.1} parent=1 // pred_fallthru
      _
    // Predicated region
    $region6: #{tpu_custom_call.1} parent=1 // pred_check
      _
    $region7: #{tpu_custom_call.1} parent=1 // pred_check_branch
      %15 = sbr.rel (0) target = $region9
    $region8: #{tpu_custom_call.1} parent=1 // pred_region
      _
    $region9: #{tpu_custom_call.1} parent=1 // pred_fallthru
      _
    // Predicated region
    $region10: #{tpu_custom_call.1} parent=1 // pred_check
      _
    $region11: #{tpu_custom_call.1} parent=1 // pred_check_branch
      %17 = sbr.rel (0) target = $region13
    $region12: #{tpu_custom_call.1} parent=1 // pred_region
      _
    $region13: #{tpu_custom_call.1} parent=1 // pred_fallthru
      _
    // Predicated region
    $region14: #{tpu_custom_call.1} parent=1 // pred_check
      _
    $region15: #{tpu_custom_call.1} parent=1 // pred_check_branch
      %19 = sbr.rel (0) target = $region17
    $region16: #{tpu_custom_call.1} parent=1 // pred_region
      _
    $region17: #{tpu_custom_call.1} parent=1 // pred_fallthru
      _
    // Predicated region
    $region18: #{tpu_custom_call.1} parent=1 // pred_check
      _
    $region19: #{tpu_custom_call.1} parent=1 // pred_check_branch
      %21 = sbr.rel (0) target = $region21
    $region20: #{tpu_custom_call.1} parent=1 // pred_region
      _
    $region21: #{tpu_custom_call.1} parent=1 // pred_fallthru
      _
    // Predicated region
    $region22: #{tpu_custom_call.1} parent=1 // pred_check
      _
    $region23: #{tpu_custom_call.1} parent=1 // pred_check_branch
      %23 = sbr.rel (0) target = $region25
    $region24: #{tpu_custom_call.1} parent=1 // pred_region
      _
    $region25: #{tpu_custom_call.1} parent=1 // pred_fallthru
      _
    %v25 = vld [vmem:[%s0] sm:$0xf]
    %v26 = vld [vmem:[%s0 + $0x4] sm:$0xf]
    %v27 = vld [vmem:[%s1] sm:$0xf]
    %v28 = vld [vmem:[%s1 + $0x4] sm:$0xf]
    %v29 = vld [vmem:[%s1 + $0x8] sm:$0xf]
    %v30 = vld [vmem:[%s1 + $0xc] sm:$0xf]
    %v31 = vld [vmem:[%s2] sm:$0x1]
    %v33 = vlaneseq
    %v34 = vshrl.u32 %v33, 7
    %v35 = vsub.s32 0, %v34
    %v36 = vrot.slane %v31, %v35
    %v40 = vunpack.c.l.b16 %v25
    %v41 = vunpack.c.l.b16 %v26
    %v42 = vpack.c.b16 %v41, %v40
    %v47 = vunpack.c.l.b16 %v27
    %v48 = vunpack.c.l.b16 %v28
    %v49 = vunpack.c.l.b16 %v29
    %v50 = vunpack.c.l.b16 %v30
    %v51 = vpack.c.b16 %v48, %v47
    %v52 = vpack.c.b16 %v50, %v49
    %vm55 = vcmask 261120
    %v57 = vsel %vm55, %v42, 0
    %59 = vmatprep.subr.bf16.mxu0 0
    %60 = vmatpush1.bf16.msra.mxu0 %v51
    %61 = vmatprep.subr.bf16.mxu0 0
    %62 = vmatpush1.bf16.msra.mxu0 %v52
    %63 = vmatprep.subr.bf16.mxu0 0
    %64 = vmatpush1.bf16.msra.mxu0 0
    %65 = vmatprep.subr.bf16.mxu0 0
    %66 = vmatpush1.bf16.msra.mxu0 0
    %67 = vmatprep.subr.bf16.mxu0 0
    %68 = vmatpush1.bf16.msra.mxu0 0
    %69 = vmatprep.subr.bf16.mxu0 0
    %70 = vmatpush1.bf16.msra.mxu0 0
    %71 = vmatprep.subr.bf16.mxu0 0
    %72 = vmatpush1.bf16.msra.mxu0 0
    %73 = vmatprep.subr.bf16.mxu0 0
    %74 = vmatpush1.bf16.msra.mxu0 0
    %75 = vmatprep.subr.bf16.mxu0 0
    %76 = vmatpush1.bf16.msra.mxu0 0
    %77 = vmatprep.subr.bf16.mxu0 0
    %78 = vmatpush1.bf16.msra.mxu0 0
    %79 = vmatprep.subr.bf16.mxu0 0
    %80 = vmatpush1.bf16.msra.mxu0 0
    %81 = vmatprep.subr.bf16.mxu0 0
    %82 = vmatpush1.bf16.msra.mxu0 0
    %83 = vmatprep.subr.bf16.mxu0 0
    %84 = vmatpush1.bf16.msra.mxu0 0
    %85 = vmatprep.subr.bf16.mxu0 0
    %86 = vmatpush1.bf16.msra.mxu0 0
    %87 = vmatprep.subr.bf16.mxu0 0
    %88 = vmatpush1.bf16.msra.mxu0 0
    %89 = vmatprep.subr.bf16.mxu0 0
    %90 = vmatpush1.bf16.msra.mxu0 0
    %91 = vmatprep.mubr.bf16.mxu0 0
    %92 = vmatmul.mubr.bf16.gmra.mrb[0].mxu0 %v57
    %v93 = vpop.f32.mrb[0].mxu0
    %v94 = vadd.f32 %v36, %v93
    %v95 = vpop.f32.mrb[0].mxu0
    %v96 = vpop.f32.mrb[0].mxu0
    %v97 = vadd.f32 %v36, %v96
    %v98 = vpop.f32.mrb[0].mxu0
    %99 = vdwg.mxu0
    %v100 = vmax.f32 %v94, 0.0
    %v101 = vmax.f32 %v97, 0.0
    %v102 = vpack.c.bf16 %v101, %v100
    %v103 = vld [vmem:[%s3] sm:$0xf]
    %v104 = vld [vmem:[%s3 + $0x4] sm:$0xf]
    %v105 = vld [vmem:[%s3 + $0x8] sm:$0xf]
    %v106 = vld [vmem:[%s3 + $0xc] sm:$0xf]
    %v107 = vld [vmem:[%s3 + $0x10] sm:$0xf]
    %v108 = vld [vmem:[%s3 + $0x14] sm:$0xf]
    %v109 = vld [vmem:[%s3 + $0x18] sm:$0xf]
    %v110 = vld [vmem:[%s3 + $0x1c] sm:$0xf]
    %v111 = vld [vmem:[%s3 + $0x20] sm:$0xf]
    %v112 = vld [vmem:[%s3 + $0x24] sm:$0xf]
    %v113 = vld [vmem:[%s3 + $0x28] sm:$0xf]
    %v114 = vld [vmem:[%s3 + $0x2c] sm:$0xf]
    %v115 = vld [vmem:[%s3 + $0x30] sm:$0xf]
    %v116 = vld [vmem:[%s3 + $0x34] sm:$0xf]
    %v117 = vld [vmem:[%s3 + $0x38] sm:$0xf]
    %v118 = vld [vmem:[%s3 + $0x3c] sm:$0xf]
    %v119 = vld [vmem:[%s4] sm:$0x1]
    %v121 = vlaneseq
    %v122 = vshrl.u32 %v121, 7
    %v123 = vsub.s32 0, %v122
    %v124 = vrot.slane %v119, %v123
    %v142 = vunpack.c.l.b16 %v103
    %v143 = vunpack.c.l.b16 %v104
    %v144 = vunpack.c.l.b16 %v105
    %v145 = vunpack.c.l.b16 %v106
    %v146 = vunpack.c.l.b16 %v107
    %v147 = vunpack.c.l.b16 %v108
    %v148 = vunpack.c.l.b16 %v109
    %v149 = vunpack.c.l.b16 %v110
    %v150 = vunpack.c.l.b16 %v111
    %v151 = vunpack.c.l.b16 %v112
    %v152 = vunpack.c.l.b16 %v113
    %v153 = vunpack.c.l.b16 %v114
    %v154 = vunpack.c.l.b16 %v115
    %v155 = vunpack.c.l.b16 %v116
    %v156 = vunpack.c.l.b16 %v117
    %v157 = vunpack.c.l.b16 %v118
    %v158 = vpack.c.b16 %v143, %v142
    %v159 = vpack.c.b16 %v145, %v144
    %v160 = vpack.c.b16 %v147, %v146
    %v161 = vpack.c.b16 %v149, %v148
    %v162 = vpack.c.b16 %v151, %v150
    %v163 = vpack.c.b16 %v153, %v152
    %v164 = vpack.c.b16 %v155, %v154
    %v165 = vpack.c.b16 %v157, %v156
    %174 = vmatprep.subr.bf16.mxu0 0
    %175 = vmatpush1.bf16.msra.mxu0 %v158
    %176 = vmatprep.subr.bf16.mxu0 0
    %177 = vmatpush1.bf16.msra.mxu0 %v159
    %178 = vmatprep.subr.bf16.mxu0 0
    %179 = vmatpush1.bf16.msra.mxu0 %v160
    %180 = vmatprep.subr.bf16.mxu0 0
    %181 = vmatpush1.bf16.msra.mxu0 %v161
    %182 = vmatprep.subr.bf16.mxu0 0
    %183 = vmatpush1.bf16.msra.mxu0 %v162
    %184 = vmatprep.subr.bf16.mxu0 0
    %185 = vmatpush1.bf16.msra.mxu0 %v163
    %186 = vmatprep.subr.bf16.mxu0 0
    %187 = vmatpush1.bf16.msra.mxu0 %v164
    %188 = vmatprep.subr.bf16.mxu0 0
    %189 = vmatpush1.bf16.msra.mxu0 %v165
    %190 = vmatprep.subr.bf16.mxu0 0
    %191 = vmatpush1.bf16.msra.mxu0 0
    %192 = vmatprep.subr.bf16.mxu0 0
    %193 = vmatpush1.bf16.msra.mxu0 0
    %194 = vmatprep.subr.bf16.mxu0 0
    %195 = vmatpush1.bf16.msra.mxu0 0
    %196 = vmatprep.subr.bf16.mxu0 0
    %197 = vmatpush1.bf16.msra.mxu0 0
    %198 = vmatprep.subr.bf16.mxu0 0
    %199 = vmatpush1.bf16.msra.mxu0 0
    %200 = vmatprep.subr.bf16.mxu0 0
    %201 = vmatpush1.bf16.msra.mxu0 0
    %202 = vmatprep.subr.bf16.mxu0 0
    %203 = vmatpush1.bf16.msra.mxu0 0
    %204 = vmatprep.subr.bf16.mxu0 0
    %205 = vmatpush1.bf16.msra.mxu0 0
    %206 = vmatprep.mubr.bf16.mxu0 0
    %207 = vmatmul.mubr.bf16.gmra.mrb[0].mxu0 %v102
    %v208 = vpop.f32.mrb[0].mxu0
    %v209 = vadd.f32 %v124, %v208
    %v210 = vpop.f32.mrb[0].mxu0
    %v211 = vpop.f32.mrb[0].mxu0
    %v212 = vadd.f32 %v124, %v211
    %v213 = vpop.f32.mrb[0].mxu0
    %214 = vdwg.mxu0
    %v215 = vmax.f32 %v209, 0.0
    %v216 = vmax.f32 %v212, 0.0
    %v217 = vpack.c.bf16 %v216, %v215
    %v218 = vld [vmem:[%s5] sm:$0xf]
    %v219 = vld [vmem:[%s5 + $0x4] sm:$0xf]
    %v220 = vld [vmem:[%s5 + $0x8] sm:$0xf]
    %v221 = vld [vmem:[%s5 + $0xc] sm:$0xf]
    %v222 = vld [vmem:[%s5 + $0x10] sm:$0xf]
    %v223 = vld [vmem:[%s5 + $0x14] sm:$0xf]
    %v224 = vld [vmem:[%s5 + $0x18] sm:$0xf]
    %v225 = vld [vmem:[%s5 + $0x1c] sm:$0xf]
    %v234 = vunpack.c.l.b16 %v218
    %v235 = vunpack.c.l.b16 %v219
    %v236 = vunpack.c.l.b16 %v220
    %v237 = vunpack.c.l.b16 %v221
    %v238 = vunpack.c.l.b16 %v222
    %v239 = vunpack.c.l.b16 %v223
    %v240 = vunpack.c.l.b16 %v224
    %v241 = vunpack.c.l.b16 %v225
    %v242 = vpack.c.b16 %v235, %v234
    %v243 = vpack.c.b16 %v237, %v236
    %v244 = vpack.c.b16 %v239, %v238
    %v245 = vpack.c.b16 %v241, %v240
    %vm250 = vcmask 523264
    %v252 = vsel %vm250, %v217, 0
    %254 = vmatprep.subr.bf16.mxu0 0
    %255 = vmatpush1.bf16.msra.mxu0 %v242
    %256 = vmatprep.subr.bf16.mxu0 0
    %257 = vmatpush1.bf16.msra.mxu0 %v243
    %258 = vmatprep.subr.bf16.mxu0 0
    %259 = vmatpush1.bf16.msra.mxu0 %v244
    %260 = vmatprep.subr.bf16.mxu0 0
    %261 = vmatpush1.bf16.msra.mxu0 %v245
    %262 = vmatprep.subr.bf16.mxu0 0
    %263 = vmatpush1.bf16.msra.mxu0 0
    %264 = vmatprep.subr.bf16.mxu0 0
    %265 = vmatpush1.bf16.msra.mxu0 0
    %266 = vmatprep.subr.bf16.mxu0 0
    %267 = vmatpush1.bf16.msra.mxu0 0
    %268 = vmatprep.subr.bf16.mxu0 0
    %269 = vmatpush1.bf16.msra.mxu0 0
    %270 = vmatprep.subr.bf16.mxu0 0
    %271 = vmatpush1.bf16.msra.mxu0 0
    %272 = vmatprep.subr.bf16.mxu0 0
    %273 = vmatpush1.bf16.msra.mxu0 0
    %274 = vmatprep.subr.bf16.mxu0 0
    %275 = vmatpush1.bf16.msra.mxu0 0
    %276 = vmatprep.subr.bf16.mxu0 0
    %277 = vmatpush1.bf16.msra.mxu0 0
    %278 = vmatprep.subr.bf16.mxu0 0
    %279 = vmatpush1.bf16.msra.mxu0 0
    %280 = vmatprep.subr.bf16.mxu0 0
    %281 = vmatpush1.bf16.msra.mxu0 0
    %282 = vmatprep.subr.bf16.mxu0 0
    %283 = vmatpush1.bf16.msra.mxu0 0
    %284 = vmatprep.subr.bf16.mxu0 0
    %285 = vmatpush1.bf16.msra.mxu0 0
    %286 = vmatprep.mubr.bf16.mxu0 0
    %287 = vmatmul.mubr.bf16.gmra.mrb[0].mxu0 %v252
    %v288 = vpop.f32.mrb[0].mxu0
    %v289 = vadd.f32 0.0, %v288
    %v290 = vpop.f32.mrb[0].mxu0
    %v291 = vpop.f32.mrb[0].mxu0
    %v292 = vadd.f32 0.0, %v291
    %v293 = vpop.f32.mrb[0].mxu0
    %294 = vdwg.mxu0
    %295 = vst [vmem:[#allocation2] sm:$0xff] %v289
    %296 = vst [vmem:[#allocation2 + $0x8] sm:$0xff] %v292
    // Predicated region
    $region26: #{tpu_custom_call.1} parent=1 // pred_check
      _
    $region27: #{tpu_custom_call.1} parent=1 // pred_check_branch
      %298 = sbr.rel (0) target = $region29
    $region28: #{tpu_custom_call.1} parent=1 // pred_region
      %s300 = ssub.s32 256, 256
      %301 = vsyncadd [#allocation3], %s300
      %s302 = sshll.u32 [#allocation2], 4
      %s303 = int_to_ptr.vmem [resolvable:$true] %s302
      %308 = dma.vmem_to_hbm [thread:$0]  %s303, 256, %s6, [#allocation3], 128, 128, 8
    $region29: #{tpu_custom_call.1} parent=1 // pred_fallthru
      _
    // Predicated region
    $region30: #{tpu_custom_call.1} parent=1 // pred_check
      _
    $region31: #{tpu_custom_call.1} parent=1 // pred_check_branch
      %310 = sbr.rel (0) target = $region33
    $region32: #{tpu_custom_call.1} parent=1 // pred_region
      %311 = dma.done [#allocation3], 256
    $region33: #{tpu_custom_call.1} parent=1 // pred_fallthru
      _
    %312 = vsyncpa [#allocation3], 1

</llo_original>
